<compile_context>
chip_gen: v6e
topology: v6e:2x2x1
jax: 0.10.0
libtpu: 0.0.40
codegen_flags: <defaults>
</compile_context>

<pallas_src>
import jax
import jax.numpy as jnp
from jax.experimental import pallas as pl
from jax.experimental.pallas import tpu as pltpu


def _build_pe(seq_size: int, d_model: int) -> jnp.ndarray:
    """Deterministic sin/cos positional-encoding table, matching the torch loop."""
    pos = jnp.arange(seq_size, dtype=jnp.float32)[:, None]      # (S, 1)
    i = jnp.arange(d_model, dtype=jnp.float32)[None, :]         # (1, D)
    even_i = jnp.floor(i / 2.0) * 2.0                           # i if even, i-1 if odd
    angle = pos / jnp.power(10000.0, even_i / float(d_model))   # (S, D)
    is_even = (jnp.arange(d_model) % 2 == 0)[None, :]
    pe = jnp.where(is_even, jnp.sin(angle), jnp.cos(angle))
    return pe.astype(jnp.float32)                                # (S, D)


def _pe_add_kernel(x_ref, pe_ref, o_ref):
    # Batch dim squeezed: x_ref / pe_ref / o_ref all share the same 2-D tile shape.
    o_ref[...] = (x_ref[...] + pe_ref[...]).astype(o_ref.dtype)


def _pe_add_kernel_batched(x_ref, pe_ref, o_ref):
    # x_ref/o_ref: (B, tR, L); pe_ref: (tR, L) broadcast over batch.
    o_ref[...] = (x_ref[...] + pe_ref[...][None, :, :]).astype(o_ref.dtype)


# Target per-block bytes (per array) for the tiled path.  With x / pe / out
# each double-buffered this is ~12 MiB of VMEM -- comfortably under the raised
# 32 MiB scoped-VMEM limit on every chip, and already on the measured
# tile-size roofline plateau for mem-bound elementwise kernels.
_TARGET_BLOCK_BYTES = 2 * 1024 * 1024


def _pick_lane_width(flat: int) -> int | None:
    """Widest lane dim (multiple of 128, up to 1024) dividing the flattened row."""
    for lanes in (1024, 512, 256, 128):
        if flat % lanes == 0:
            return lanes
    return None


def positional_encoding_forward(x: jnp.ndarray, pe: jnp.ndarray) -> jnp.ndarray:
    """x: (B, S, D); pe: (S_max, D) with S_max >= S. Returns x + pe[:S]."""
    B, S, D = x.shape
    pe_s = pe[:S, :].astype(x.dtype)          # glue: slice + dtype match outside kernel
    itemsize = x.dtype.itemsize
    F = S * D

    lanes = _pick_lane_width(F)
    if lanes is None:
        # Fallback: per-batch full (S, D) block (full-extent blocks satisfy the
        # (8,128) rule for any shape).  Batch dim squeezed out of the kernel view.
        return pl.pallas_call(
            _pe_add_kernel,
            out_shape=jax.ShapeDtypeStruct((B, S, D), x.dtype),
            grid_spec=pltpu.PrefetchScalarGridSpec(
                num_scalar_prefetch=0,
                grid=(B,),
                in_specs=[
                    pl.BlockSpec((None, S, D), lambda b: (b, 0, 0)),
                    pl.BlockSpec((S, D), lambda b: (0, 0)),
                ],
                out_specs=pl.BlockSpec((None, S, D), lambda b: (b, 0, 0)),
            ),
            compiler_params=pltpu.CompilerParams(
                dimension_semantics=("parallel",)),
        )(x, pe_s)

    # Lane-dense view: flatten (S, D) -> (R, lanes) rows of full-lane vregs.
    R = F // lanes
    xr = x.reshape(B, R, lanes)
    per = pe_s.reshape(R, lanes)

    # Row-tile size: ~2 MiB per block; multiple of 8 sublanes (or full extent).
    target_rows = max(8, _TARGET_BLOCK_BYTES // (lanes * itemsize))
    if R <= target_rows:
        t_r = R
    else:
        t_r = (target_rows // 8) * 8
    n_r = pl.cdiv(R, t_r)

    total_bytes = B * R * lanes * itemsize
    if total_bytes <= _TARGET_BLOCK_BYTES:
        # Tiny problem: pack the whole batch into each grid step (usually a
        # single step) to amortize per-step overhead.
        out_r = pl.pallas_call(
            _pe_add_kernel_batched,
            out_shape=jax.ShapeDtypeStruct((B, R, lanes), x.dtype),
            grid_spec=pltpu.PrefetchScalarGridSpec(
                num_scalar_prefetch=0,
                grid=(n_r,),
                in_specs=[
                    pl.BlockSpec((B, t_r, lanes), lambda r: (0, r, 0)),
                    pl.BlockSpec((t_r, lanes), lambda r: (r, 0)),
                ],
                out_specs=pl.BlockSpec((B, t_r, lanes), lambda r: (0, r, 0)),
            ),
            compiler_params=pltpu.CompilerParams(
                dimension_semantics=("parallel",)),
        )(xr, per)
    else:
        # General tiled path: grid = (row_tiles, B), batch innermost so the pe
        # tile's block index is unchanged across the batch loop (DMA skipped).
        out_r = pl.pallas_call(
            _pe_add_kernel,
            out_shape=jax.ShapeDtypeStruct((B, R, lanes), x.dtype),
            grid_spec=pltpu.PrefetchScalarGridSpec(
                num_scalar_prefetch=0,
                grid=(n_r, B),
                in_specs=[
                    pl.BlockSpec((None, t_r, lanes), lambda r, b: (b, r, 0)),
                    pl.BlockSpec((t_r, lanes), lambda r, b: (r, 0)),
                ],
                out_specs=pl.BlockSpec((None, t_r, lanes), lambda r, b: (b, r, 0)),
            ),
            compiler_params=pltpu.CompilerParams(
                dimension_semantics=("parallel", "parallel"),
                vmem_limit_bytes=32 * 1024 * 1024,
            ),
        )(xr, per)

    return out_r.reshape(B, S, D)


if __name__ == "__main__":
    # Module config (deterministic, synthetic).
    d_model = 32
    seq_size = 16
    dropout = 0.1  # TODO(synk): nn.Dropout is constructed but never applied in forward(); no-op here.

    # Small toy case: batch=2, seq=8 (<= seq_size), hidden=d_model.
    B, S, D = 2, 8, d_model
    key = jax.random.PRNGKey(0)
    x = jax.random.normal(key, (B, S, D), dtype=jnp.float32)
    pe = _build_pe(seq_size, d_model)

    out = positional_encoding_forward(x, pe)
    out = jax.block_until_ready(out)
    ref = x + pe[None, :S, :]
    assert out.shape == (B, S, D)
    assert jnp.allclose(out, ref, atol=1e-6, rtol=1e-6), "mismatch vs reference (small)"

    # Exercise the tiled (general) lane-dense path at a moderate size.
    B2, S2, D2 = 4, 512, 512
    x2 = jax.random.normal(jax.random.PRNGKey(1), (B2, S2, D2), dtype=jnp.float32)
    pe2 = _build_pe(S2, D2)
    out2 = jax.block_until_ready(positional_encoding_forward(x2, pe2))
    ref2 = x2 + pe2[None, :S2, :]
    assert jnp.allclose(out2, ref2, atol=1e-5, rtol=1e-5), "mismatch vs reference (tiled)"

    # Exercise the non-128-divisible fallback path.
    B3, S3, D3 = 2, 5, 24
    x3 = jax.random.normal(jax.random.PRNGKey(2), (B3, S3, D3), dtype=jnp.float32)
    pe3 = _build_pe(8, D3)
    out3 = jax.block_until_ready(positional_encoding_forward(x3, pe3))
    ref3 = x3 + pe3[None, :S3, :]
    assert jnp.allclose(out3, ref3, atol=1e-6, rtol=1e-6), "mismatch vs reference (fallback)"

    # bf16 path (pe cast to input dtype in the wrapper halves pe traffic).
    x4 = jax.random.normal(jax.random.PRNGKey(3), (2, 16, d_model), dtype=jnp.bfloat16)
    out4 = jax.block_until_ready(positional_encoding_forward(x4, pe))
    ref4 = x4 + pe[None, :16, :].astype(jnp.bfloat16)
    assert jnp.allclose(out4.astype(jnp.float32), ref4.astype(jnp.float32),
                        atol=1e-2, rtol=1e-2), "mismatch vs reference (bf16)"

    print("KERNEL_OK")
</pallas_src>

<mosaic_0001>
module attributes {stable_mosaic.version = 11 : i64} {
  func.func @_pe_add_kernel_batched(%arg0: i32, %arg1: memref<2x1x256xf32, #tpu.memory_space<vmem>>, %arg2: memref<1x256xf32, #tpu.memory_space<vmem>>, %arg3: memref<2x1x256xf32, #tpu.memory_space<vmem>>) attributes {dimension_semantics = [#tpu.dimension_semantics<parallel>], iteration_bounds = array<i64: 1>, scalar_prefetch = 0 : i64, scratch_operands = 0 : i64, tpu.core_type = #tpu.core_type<tc>, window_params = [{transform_indices = @transform_0, window_bounds = array<i64: 2, 1, 256>}, {transform_indices = @transform_1, window_bounds = array<i64: 1, 256>}, {transform_indices = @transform_2, window_bounds = array<i64: 2, 1, 256>}]} {
    %c0 = arith.constant 0 : index
    %c0_0 = arith.constant 0 : index
    %c0_1 = arith.constant 0 : index
    %0 = vector.load %arg1[%c0, %c0_0, %c0_1] : memref<2x1x256xf32, #tpu.memory_space<vmem>>, vector<2x1x256xf32>
    %c0_2 = arith.constant 0 : index
    %c0_3 = arith.constant 0 : index
    %1 = vector.load %arg2[%c0_2, %c0_3] : memref<1x256xf32, #tpu.memory_space<vmem>>, vector<1x256xf32>
    %2 = vector.shape_cast %1 : vector<1x256xf32> to vector<1x1x256xf32>
    %3 = vector.broadcast %2 : vector<1x1x256xf32> to vector<2x1x256xf32>
    %4 = arith.addf %0, %3 : vector<2x1x256xf32>
    %c0_4 = arith.constant 0 : index
    %c0_5 = arith.constant 0 : index
    %c0_6 = arith.constant 0 : index
    %5 = vector.load %arg3[%c0_4, %c0_5, %c0_6] : memref<2x1x256xf32, #tpu.memory_space<vmem>>, vector<2x1x256xf32>
    tpu.vector_store %arg3[%c0_4, %c0_5, %c0_6], %4 {strides = array<i32>} : memref<2x1x256xf32, #tpu.memory_space<vmem>>, vector<2x1x256xf32>,
    return
  }
  func.func @transform_0(%arg0: i32) -> (i32, i32, i32) {
    %c0_i32 = arith.constant 0 : i32
    %c0_i32_0 = arith.constant 0 : i32
    %c0_i32_1 = arith.constant 0 : i32
    return %c0_i32, %arg0, %c0_i32_0 : i32, i32, i32
  }
  func.func @transform_1(%arg0: i32) -> (i32, i32) {
    %c0_i32 = arith.constant 0 : i32
    %c0_i32_0 = arith.constant 0 : i32
    return %arg0, %c0_i32 : i32, i32
  }
  func.func @transform_2(%arg0: i32) -> (i32, i32, i32) {
    %c0_i32 = arith.constant 0 : i32
    %c0_i32_0 = arith.constant 0 : i32
    %c0_i32_1 = arith.constant 0 : i32
    return %c0_i32, %arg0, %c0_i32_0 : i32, i32, i32
  }
}

</mosaic_0001>

<llo_original>
// kernel: tpu_custom_call.1
$region0: #{tpu_custom_call.1}
  #allocation0 [shape = 'u32[]', space=smem, size = 0x4, offset = 0x4, fixed_abs, tag = 'smem constant byte address 0x4 - core index']
  #allocation1 [shape = 'u32[144,128]{1,0:T(1,128)}', space=vmem, size = 0x12000, scoped, tag = 'internal scratch']
  %s0 = inlined_call_operand.hbm [shape: f32[2,1,256], index: 0, kind: input, shape index: {}]
  %s1 = inlined_call_operand.hbm [shape: f32[1,256], index: 1, kind: input, shape index: {}]
  %s2 = inlined_call_operand.hbm [shape: f32[2,1,256], index: 2, kind: output, shape index: {}]
  %s3 = sld [smem:[#allocation0]]
  $region26: #{tpu_custom_call.1} parent=0
    _
  %s5 = ssub.s32 1, %s3
  %s6 = scalar_select 0, %s5, %s3
  $region1: #{tpu_custom_call.1} parent=0
    #allocation2 [shape = 'u8[2048]{0}', space=vmem, size = 0x800, scoped, tag = 'input window, operand 0, single buffered']
    #allocation3 [shape = 's32[1]{0}', space=sflag, size = 0x4, scoped, tag = 'scoped memory for tpu_custom_call.1']
    #allocation4 [shape = 's32[1]{0}', space=sflag, size = 0x4, scoped, tag = 'scoped memory for tpu_custom_call.1']
    #allocation5 [shape = 'u8[1024]{0}', space=vmem, size = 0x400, scoped, tag = 'input window, operand 1, single buffered']
    #allocation6 [shape = 's32[1]{0}', space=sflag, size = 0x4, scoped, tag = 'scoped memory for tpu_custom_call.1']
    #allocation7 [shape = 'u8[2048]{0}', space=vmem, size = 0x800, scoped, tag = 'output window, operand 0, single buffered']
    %7 = vsyncpa [#allocation3], 0
    %8 = vsyncpa [#allocation6], 0
    %9 = vsyncpa [#allocation4], 0
    // Predicated region
    $region2: #{tpu_custom_call.1} parent=1 // pred_check
      _
    $region3: #{tpu_custom_call.1} parent=1 // pred_check_branch
      %11 = sbr.rel (0) target = $region5
    $region4: #{tpu_custom_call.1} parent=1 // pred_region
      %s13 = ssub.s32 64, 64
      %14 = vsyncadd [#allocation3], %s13
      %s15 = sshll.u32 [#allocation2], 4
      %s16 = int_to_ptr.vmem [resolvable:$true] %s15
      %21 = dma.hbm_to_vmem [thread:$0]  %s0, 64, %s16, [#allocation3], 32, 32, 2
    $region5: #{tpu_custom_call.1} parent=1 // pred_fallthru
      _
    // Predicated region
    $region6: #{tpu_custom_call.1} parent=1 // pred_check
      _
    $region7: #{tpu_custom_call.1} parent=1 // pred_check_branch
      %23 = sbr.rel (0) target = $region9
    $region8: #{tpu_custom_call.1} parent=1 // pred_region
      %s25 = ssub.s32 32, 32
      %26 = vsyncadd [#allocation6], %s25
      %s28 = sshll.u32 [#allocation5], 4
      %s29 = int_to_ptr.vmem [resolvable:$true] %s28
      %31 = dma.hbm_to_vmem [thread:$0]  %s1, 32, %s29, [#allocation6]
    $region9: #{tpu_custom_call.1} parent=1 // pred_fallthru
      _
    // Predicated region
    $region10: #{tpu_custom_call.1} parent=1 // pred_check
      _
    $region11: #{tpu_custom_call.1} parent=1 // pred_check_branch
      %33 = sbr.rel (0) target = $region13
    $region12: #{tpu_custom_call.1} parent=1 // pred_region
      %34 = dma.done [#allocation3], 64
    $region13: #{tpu_custom_call.1} parent=1 // pred_fallthru
      _
    // Predicated region
    $region14: #{tpu_custom_call.1} parent=1 // pred_check
      _
    $region15: #{tpu_custom_call.1} parent=1 // pred_check_branch
      %36 = sbr.rel (0) target = $region17
    $region16: #{tpu_custom_call.1} parent=1 // pred_region
      %37 = dma.done [#allocation6], 32
    $region17: #{tpu_custom_call.1} parent=1 // pred_fallthru
      _
    %v38 = vld [vmem:[#allocation2] sm:$0x3]
    %v39 = vld [vmem:[#allocation2 + $0x2] sm:$0x3]
    %v40 = vld [vmem:[#allocation5] sm:$0x3]
    %v41 = vadd.f32 %v38, %v40
    %v42 = vadd.f32 %v39, %v40
    %v43 = vlaneseq
    %vm44 = vcmp.ge.s32.totalorder %v43, 0
    %vm45 = vcmp.lt.s32.totalorder %v43, 256
    %vm46 = vmand %vm44, %vm45
    %47 = vst.msk [vmem:[#allocation7] sm:$0x3] %vm46, %v41
    %48 = vst.msk [vmem:[#allocation7 + $0x2] sm:$0x3] %vm46, %v42
    // Predicated region
    $region18: #{tpu_custom_call.1} parent=1 // pred_check
      _
    $region19: #{tpu_custom_call.1} parent=1 // pred_check_branch
      %50 = sbr.rel (0) target = $region21
    $region20: #{tpu_custom_call.1} parent=1 // pred_region
      %s52 = ssub.s32 64, 64
      %53 = vsyncadd [#allocation4], %s52
      %s54 = sshll.u32 [#allocation7], 4
      %s55 = int_to_ptr.vmem [resolvable:$true] %s54
      %60 = dma.vmem_to_hbm [thread:$0]  %s55, 64, %s2, [#allocation4], 32, 32, 2
    $region21: #{tpu_custom_call.1} parent=1 // pred_fallthru
      _
    // Predicated region
    $region22: #{tpu_custom_call.1} parent=1 // pred_check
      _
    $region23: #{tpu_custom_call.1} parent=1 // pred_check_branch
      %62 = sbr.rel (0) target = $region25
    $region24: #{tpu_custom_call.1} parent=1 // pred_region
      %63 = dma.done [#allocation4], 64
    $region25: #{tpu_custom_call.1} parent=1 // pred_fallthru
      _
    %64 = vsyncpa [#allocation3], 1
    %65 = vsyncpa [#allocation6], 1
    %66 = vsyncpa [#allocation4], 1

</llo_original>
